<compile_context>
chip_gen: v5e
topology: v5e:2x2
jax: 0.10.0
libtpu: 0.0.40
codegen_flags: <defaults>
</compile_context>

<pallas_src>
import numpy as np
import jax
import jax.numpy as jnp
from jax.experimental import pallas as pl
from jax.experimental.pallas import tpu as pltpu


# ---------------------------------------------------------------------------
# Fused kernel: one grid step == one selected video.
#   rows 2k+s (s = stream) of the CAS block -> masked softmax (H and beta-
#   scaled L) -> pooled features -> L2 normalize -> cosines vs the matching
#   center bank -> target / hardest-negative cosines, packed lane-dense.
# ---------------------------------------------------------------------------
def _a2cl_video_kernel(vid_ref, len_ref,                         # scalar prefetch (SMEM)
                       logits_ref, cas_ref, beta_ref, tmask_ref, centers_ref,  # VMEM in
                       out_ref):                                 # VMEM out
    i = pl.program_id(0)
    R, T = cas_ref.shape            # R = 2*K_pad, row 2k+s = (pair k, stream s)
    C = tmask_ref.shape[-1]

    len_i = len_ref[i]

    # ---- attention logits: H rows (raw CAS) then L rows (beta-scaled CAS)
    rows_h = cas_ref[...]                                  # (R, T)
    rows_l = rows_h * beta_ref[...]                        # (R, T) * (R, 1)
    rows = jnp.concatenate([rows_h, rows_l], axis=0)       # (2R, T)

    # ---- masked softmax over time (fused mask: exp(-1e30 - m) underflows to 0)
    valid = jax.lax.broadcasted_iota(jnp.int32, (1, T), 1) < len_i
    masked = jnp.where(valid, rows, jnp.float32(-1e30))
    m = jnp.max(masked, axis=1, keepdims=True)             # (2R, 1)
    e = jnp.exp(masked - m)                                # (2R, T)
    denom = jnp.sum(e, axis=1, keepdims=True)
    # approx reciprocal: the common per-row scale cancels after L2 normalization.
    atn = e * pl.reciprocal(denom, approx=True)            # (2R, T)

    # ---- one MXU matmul for all pooled features: (2R, T) @ (T, D)
    lg = logits_ref[...]                                   # (T, D), already matmul dtype
    feats = jnp.dot(atn.astype(lg.dtype), lg,
                    preferred_element_type=jnp.float32)    # (2R, D) f32

    # ---- L2 normalize (F.normalize semantics), one cosine matmul vs both banks
    nrm = jnp.sqrt(jnp.sum(feats * feats, axis=1, keepdims=True))
    feats_n = feats / jnp.maximum(nrm, 1e-12)
    cen = centers_ref[...]                                 # (2C, D) pre-normalized
    dn = (((1,), (1,)), ((), ()))                          # contract D
    cos = jax.lax.dot_general(feats_n.astype(cen.dtype), cen, dn,
                              preferred_element_type=jnp.float32)   # (2R, 2C)

    # ---- pick the matching center bank per row (stream s = row % 2)
    cos_h = cos[0:R]                                       # H rows
    cos_l = cos[R:2 * R]                                   # L rows
    s_col = jax.lax.broadcasted_iota(jnp.int32, (R, 1), 0) % 2
    cos_hb = jnp.where(s_col == 0, cos_h[:, 0:C], cos_h[:, C:2 * C])   # (R, C)
    cos_lb = jnp.where(s_col == 0, cos_l[:, 0:C], cos_l[:, C:2 * C])

    # ---- target / hardest-negative cosines (acos is monotone decreasing, so
    #      min-distance over non-target == acos(max cosine over non-target))
    tmask = tmask_ref[...]                                 # (R, C) one-hot target class
    hic = jnp.sum(cos_hb * tmask, axis=1, keepdims=True)   # (R, 1)
    lic = jnp.sum(cos_lb * tmask, axis=1, keepdims=True)
    hrd = jnp.max(jnp.where(tmask > 0.5, jnp.float32(-2.0), cos_hb),
                  axis=1, keepdims=True)

    # ---- lane-dense output: lanes 0..2 = [hic, lic, hard]
    lane = jax.lax.broadcasted_iota(jnp.int32, (R, 128), 1)
    out_ref[...] = (jnp.where(lane == 0, hic, 0.0)
                    + jnp.where(lane == 1, lic, 0.0)
                    + jnp.where(lane == 2, hrd, 0.0))


def a2cl_video_cosines(vid, lens, logits_md, cas_rows, beta_rows, tmask_rows,
                       centers_all):
    """Returns (V_pad, 2*K_pad, 128); lanes 0..2 = [hic, lic, hard] per (pair, stream)."""
    V_pad, R, T = cas_rows.shape
    _, _, D = logits_md.shape
    C = tmask_rows.shape[-1]
    md_bytes = jnp.dtype(logits_md.dtype).itemsize

    # advisory cost for XLA's scheduler (kernel is DMA-dominated, not FLOP)
    flops = V_pad * (2 * (2 * R) * T * D + 2 * (2 * R) * D * (2 * C))
    transcendentals = V_pad * (2 * R) * T
    bytes_accessed = (V_pad * (T * D * md_bytes + R * T * 4 + R * 4
                               + R * C * 4 + R * 128 * 4)
                      + 2 * C * D * md_bytes)

    # explicit VMEM budget (v7x: 64 MiB physical / 32 MiB default scoped)
    need = (2 * T * D * md_bytes          # double-buffered logits block
            + 2 * R * T * 4               # cas rows
            + 2 * R * C * 4               # target masks
            + 4 * R * 128 * 4             # betas + output
            + 2 * 2 * C * D * md_bytes)   # centers bank (counted double-buffered)
    vmem_limit = int(min(max(2 * need + (8 << 20), 32 << 20), 128 << 20))

    return pl.pallas_call(
        _a2cl_video_kernel,
        grid_spec=pltpu.PrefetchScalarGridSpec(
            num_scalar_prefetch=2,                      # vid, len -> 1-D SMEM arrays
            grid=(V_pad,),
            in_specs=[
                # (T, D) logits block gathered per selected video
                pl.BlockSpec((None, T, D), lambda i, vid, lens: (vid[i], 0, 0)),
                # per-video CAS columns, both streams, row 2k+s
                pl.BlockSpec((None, R, T), lambda i, *_: (i, 0, 0)),
                # per-row beta for the L (beta-scaled) attention
                pl.BlockSpec((None, R, 1), lambda i, *_: (i, 0, 0)),
                # per-row one-hot target class
                pl.BlockSpec((None, R, C), lambda i, *_: (i, 0, 0)),
                # both center banks, resident across the whole grid
                pl.BlockSpec((2 * C, D), lambda i, *_: (0, 0)),
            ],
            out_specs=pl.BlockSpec((None, R, 128), lambda i, *_: (i, 0, 0)),
        ),
        out_shape=jax.ShapeDtypeStruct((V_pad, R, 128), jnp.float32),
        compiler_params=pltpu.CompilerParams(
            dimension_semantics=("parallel",),          # one video per step -> per-TC whole videos
            vmem_limit_bytes=vmem_limit,
        ),
        cost_estimate=pl.CostEstimate(flops=int(flops),
                                      transcendentals=int(transcendentals),
                                      bytes_accessed=int(bytes_accessed)),
    )(vid, lens, logits_md, cas_rows, beta_rows, tmask_rows, centers_all)


# ---------------------------------------------------------------------------
# Module-equivalent wrapper.
# ---------------------------------------------------------------------------
class A2CLPTLossPallas:
    def __init__(self, key, num_class, dim_feature=1024, alpha=1.0,
                 beta_l=0.001, beta_h=0.1, margin1=2.0, margin2=1.0, gamma=0.6,
                 matmul_dtype=jnp.float32):
        self.num_class = num_class
        self.dim_feature = dim_feature
        self.alpha = alpha
        self.beta_l = beta_l
        self.beta_h = beta_h
        self.margin1 = margin1
        self.margin2 = margin2
        self.gamma = gamma
        self.ith = 5000
        # matmul_dtype=jnp.bfloat16 is recommended on v5e/v6e/v7x for training:
        # it halves the dominant logits DMA; cosines then differ ~1e-2 relative
        # from the f32 reference, so the strict check below uses f32.
        self.matmul_dtype = matmul_dtype
        k1, k2 = jax.random.split(key)
        c1 = jax.random.normal(k1, (num_class, dim_feature), jnp.float32)
        c2 = jax.random.normal(k2, (num_class, dim_feature), jnp.float32)
        # normalize_centers()
        self.centers1 = c1 / jnp.linalg.norm(c1, axis=1, keepdims=True)
        self.centers2 = c2 / jnp.linalg.norm(c2, axis=1, keepdims=True)

    # TODO(synk): pair selection is data-dependent host-side control flow, as in
    # the PyTorch module; it stays in Python/numpy.
    def select_pairs(self, label, iters):
        label_np = np.asarray(label)
        pairs = []
        for j in range(label_np.shape[0]):          # emitted in video order
            s = label_np[j].sum()
            if s == 1 or (s > 0 and iters >= self.ith):
                for c in np.nonzero(label_np[j])[0]:
                    pairs.append((j, int(c)))
        return pairs

    def __call__(self, logits, cas, len_features, label, iters, key):
        pairs = self.select_pairs(label, iters)
        if not pairs:
            return jnp.float32(0.0), None
        P = len(pairs)
        C = self.num_class
        _, T, D = logits.shape

        # ---- group pairs by video (select_pairs emits them already in video order)
        vid_order, groups = [], {}
        for j, c in pairs:
            if j not in groups:
                groups[j] = []
                vid_order.append(j)
            groups[j].append(c)
        V = len(vid_order)
        K_max = max(len(g) for g in groups.values())
        K_pad = max(4, int(2 ** int(np.ceil(np.log2(K_max)))))   # bucket -> (8,128) out tile
        V_pad = int(8 * -(-V // 8))                              # bucket -> few recompiles
        R = 2 * K_pad                                            # rows per half: row = 2k+s

        len_np = np.asarray(len_features).astype(np.int32)
        vid_np = np.full((V_pad,), vid_order[-1], np.int32)      # pad repeats last video
        vid_np[:V] = vid_order
        if np.any(len_np[vid_np[:V]] < 1):
            raise ValueError("A2CL-PT: selected videos must have len_features >= 1")

        cls_np = np.zeros((V_pad, K_pad), np.int32)
        kmask_np = np.zeros((V_pad, K_pad), np.float32)
        for vi, j in enumerate(vid_order):
            cl = groups[j]
            cls_np[vi, :len(cl)] = cl
            cls_np[vi, len(cl):] = cl[0]          # padded class slots reuse a real class
            kmask_np[vi, :len(cl)] = 1.0

        k_of_row = np.repeat(np.arange(K_pad), 2)                # (R,)
        s_of_row = np.tile(np.arange(2), K_pad)                  # (R,)
        cls_rows_np = cls_np[:, k_of_row]                        # (V_pad, R)
        tmask_np = (np.arange(C)[None, None, :] ==
                    cls_rows_np[:, :, None]).astype(np.float32)  # (V_pad, R, C)

        vid_arr = jnp.asarray(vid_np)
        lens_arr = jnp.asarray(len_np[vid_np])

        # ---- per-pair betas (same RNG role as the torch module)
        kb1, kb2 = jax.random.split(key)
        beta1 = jax.random.uniform(kb1, (P,), jnp.float32, self.beta_l, self.beta_h)
        beta2 = jax.random.uniform(kb2, (P,), jnp.float32, self.beta_l, self.beta_h)
        flat_vk = np.asarray([vi * K_pad + k
                              for vi, j in enumerate(vid_order)
                              for k in range(len(groups[j]))], np.int32)
        beta_flat = jnp.ones((V_pad * K_pad, 2), jnp.float32)
        beta_flat = beta_flat.at[flat_vk, 0].set(beta1).at[flat_vk, 1].set(beta2)
        beta_rows = beta_flat.reshape(V_pad, R, 1)               # row 2k+s -> beta_{s}[pair k]

        # ---- gather per-video CAS columns on the ORIGINAL (2, B, T, C) layout
        cas_f = jnp.asarray(cas, jnp.float32)
        cas_rows = cas_f[jnp.asarray(s_of_row)[None, :],         # (1, R)
                         vid_arr[:, None],                       # (V_pad, 1)
                         :,                                      # T (slice)
                         jnp.asarray(cls_rows_np)]               # (V_pad, R) -> (V_pad, R, T)

        # ---- matmul operands already in matmul_dtype (no big in-kernel casts)
        logits_md = jnp.asarray(logits).astype(self.matmul_dtype)

        def _norm(c):
            return c / jnp.maximum(jnp.linalg.norm(c, axis=1, keepdims=True), 1e-12)
        centers_all = jnp.concatenate([_norm(self.centers1), _norm(self.centers2)],
                                      axis=0).astype(self.matmul_dtype)   # (2C, D)

        out = a2cl_video_cosines(vid_arr, lens_arr, logits_md, cas_rows,
                                 beta_rows, jnp.asarray(tmask_np), centers_all)

        # ---- tiny scalar tail: clamp -> arccos -> hinge -> masked reduction
        hic = out[:, :, 0].reshape(V_pad, K_pad, 2)
        lic = out[:, :, 1].reshape(V_pad, K_pad, 2)
        hrd = out[:, :, 2].reshape(V_pad, K_pad, 2)
        clamp = lambda x: jnp.clip(x, -1.0 + 1e-7, 1.0 - 1e-7)   # avoid acos NaN from rounding
        d_hic = jnp.arccos(clamp(hic))
        d_lic = jnp.arccos(clamp(lic))
        d_hrd = jnp.arccos(clamp(hrd))
        li1 = d_hic - d_lic + self.margin1
        li2 = d_hic - d_hrd + self.margin2
        mask = jnp.asarray(kmask_np)[:, :, None]                 # real-pair mask
        s1 = jnp.sum(jnp.where(li1 > 0, li1, 0.0) * mask, axis=(0, 1))   # (2,) per stream
        s2 = jnp.sum(jnp.where(li2 > 0, li2, 0.0) * mask, axis=(0, 1))
        loss = jnp.sum((s1 * self.gamma + s2) / P) * self.alpha

        aux = dict(vid=np.asarray([j for j, _ in pairs], np.int32),
                   cls=np.asarray([c for _, c in pairs], np.int32),
                   beta1=beta1, beta2=beta2)
        return loss, aux


# ---------------------------------------------------------------------------
# Pure-JAX reference (mirrors the PyTorch forward) for verification.
# ---------------------------------------------------------------------------
def reference_loss(module, logits, cas, len_features, aux):
    vid = np.asarray(aux["vid"])
    cls = np.asarray(aux["cls"])
    beta1, beta2 = aux["beta1"], aux["beta2"]
    P = len(vid)

    def pool(s_idx, beta):
        hs, ls = [], []
        for i in range(P):
            j, c = int(vid[i]), int(cls[i])
            L = int(len_features[j])
            col = cas[s_idx, j, :L, c]
            a = jax.nn.softmax(col)
            al = jax.nn.softmax(beta[i] * col)
            hs.append(logits[j, :L].T @ a)
            ls.append(logits[j, :L].T @ al)
        return jnp.stack(hs), jnp.stack(ls)

    def aclpt(fh, fl, centers):
        eps = 1e-12
        cn = centers / jnp.maximum(jnp.linalg.norm(centers, axis=1, keepdims=True), eps)
        fhn = fh / jnp.maximum(jnp.linalg.norm(fh, axis=1, keepdims=True), eps)
        fln = fl / jnp.maximum(jnp.linalg.norm(fl, axis=1, keepdims=True), eps)
        dH = jnp.arccos(fhn @ cn.T)
        dL = jnp.arccos(fln @ cn.T)
        oh = jax.nn.one_hot(jnp.asarray(cls), centers.shape[0], dtype=jnp.float32)
        d_hic = jnp.sum(dH * oh, axis=1)
        d_lic = jnp.sum(dL * oh, axis=1)
        d_hard = jnp.min(jnp.where(oh > 0, jnp.inf, dH), axis=1)
        li1 = d_hic - d_lic + module.margin1
        li2 = d_hic - d_hard + module.margin2
        return (jnp.sum(jnp.where(li1 > 0, li1, 0.0)) * module.gamma
                + jnp.sum(jnp.where(li2 > 0, li2, 0.0))) / P

    h1, l1 = pool(0, beta1)
    h2, l2 = pool(1, beta2)
    return (aclpt(h1, l1, module.centers1) + aclpt(h2, l2, module.centers2)) * module.alpha


if __name__ == "__main__":
    B, T, D, C = 4, 16, 128, 8
    key = jax.random.PRNGKey(0)
    k_logits, k_cas, k_centers, k_beta, k_beta2 = jax.random.split(key, 5)

    logits = jax.random.normal(k_logits, (B, T, D), jnp.float32)
    cas = jax.random.normal(k_cas, (2, B, T, C), jnp.float32)
    len_features = np.array([16, 12, 9, 16], dtype=np.int32)
    # multi-hot labels: videos 0-2 have exactly one class; video 3 has two
    # classes (skipped when iters < ith, included when iters >= ith).
    label = np.zeros((B, C), dtype=np.float32)
    label[0, 1] = 1.0
    label[1, 3] = 1.0
    label[2, 5] = 1.0
    label[3, 2] = 1.0
    label[3, 6] = 1.0

    module = A2CLPTLossPallas(k_centers, num_class=C, dim_feature=D)

    # --- case 1: single-class videos only (iters < ith)
    loss, aux = module(logits, cas, len_features, label, iters=0, key=k_beta)
    loss = jax.block_until_ready(loss)
    ref = reference_loss(module, logits, cas, len_features, aux)
    np.testing.assert_allclose(np.asarray(loss), np.asarray(ref), rtol=1e-3, atol=1e-3)
    assert np.isfinite(np.asarray(loss))

    # --- case 2: multi-class video included (iters >= ith), exercises K > 1 batching
    loss2, aux2 = module(logits, cas, len_features, label, iters=6000, key=k_beta2)
    loss2 = jax.block_until_ready(loss2)
    ref2 = reference_loss(module, logits, cas, len_features, aux2)
    np.testing.assert_allclose(np.asarray(loss2), np.asarray(ref2), rtol=1e-3, atol=1e-3)
    assert np.isfinite(np.asarray(loss2))

    # --- case 3: bf16 matmul path (the recommended training config); cosines
    #     differ ~1e-2 relative from f32, so only check it runs and is finite.
    module_bf16 = A2CLPTLossPallas(k_centers, num_class=C, dim_feature=D,
                                   matmul_dtype=jnp.bfloat16)
    loss_bf16, _ = module_bf16(logits, cas, len_features, label, iters=0, key=k_beta)
    loss_bf16 = jax.block_until_ready(loss_bf16)
    assert np.isfinite(np.asarray(loss_bf16))

    print("KERNEL_OK")
</pallas_src>

<mosaic_0001>
module attributes {stable_mosaic.version = 11 : i64} {
  func.func @_a2cl_video_kernel(%arg0: i32, %arg1: memref<8xi32, #tpu.memory_space<smem>>, %arg2: memref<8xi32, #tpu.memory_space<smem>>, %arg3: memref<1x16x128xf32, #tpu.memory_space<vmem>>, %arg4: memref<1x8x16xf32, #tpu.memory_space<vmem>>, %arg5: memref<1x8x1xf32, #tpu.memory_space<vmem>>, %arg6: memref<1x8x8xf32, #tpu.memory_space<vmem>>, %arg7: memref<16x128xf32, #tpu.memory_space<vmem>>, %arg8: memref<1x8x128xf32, #tpu.memory_space<vmem>>) attributes {dimension_semantics = [#tpu.dimension_semantics<parallel>], iteration_bounds = array<i64: 8>, scalar_prefetch = 2 : i64, scratch_operands = 0 : i64, tpu.core_type = #tpu.core_type<tc>, window_params = [{transform_indices = @transform_0, window_bounds = array<i64: 1, 16, 128>}, {transform_indices = @transform_1, window_bounds = array<i64: 1, 8, 16>}, {transform_indices = @transform_2, window_bounds = array<i64: 1, 8, 1>}, {transform_indices = @transform_3, window_bounds = array<i64: 1, 8, 8>}, {pipeline_mode = #tpu.pipeline_mode<synchronous>, transform_indices = @transform_4, window_bounds = array<i64: 16, 128>}, {transform_indices = @transform_5, window_bounds = array<i64: 1, 8, 128>}]} {
    %0 = arith.index_cast %arg0 : i32 to index
    %1 = memref.load %arg2[%0] : memref<8xi32, #tpu.memory_space<smem>>
    %c0 = arith.constant 0 : index
    %c0_0 = arith.constant 0 : index
    %c0_1 = arith.constant 0 : index
    %2 = vector.load %arg4[%c0, %c0_0, %c0_1] : memref<1x8x16xf32, #tpu.memory_space<vmem>>, vector<1x8x16xf32>
    %3 = vector.shape_cast %2 : vector<1x8x16xf32> to vector<8x16xf32>
    %c0_2 = arith.constant 0 : index
    %c0_3 = arith.constant 0 : index
    %c0_4 = arith.constant 0 : index
    %4 = vector.load %arg5[%c0_2, %c0_3, %c0_4] : memref<1x8x1xf32, #tpu.memory_space<vmem>>, vector<1x8x1xf32>
    %5 = vector.shape_cast %4 : vector<1x8x1xf32> to vector<8x1xf32>
    %6 = vector.broadcast %5 : vector<8x1xf32> to vector<8x16xf32>
    %7 = arith.mulf %3, %6 : vector<8x16xf32>
    %8 = tpu.concatenate %3, %7 in 0 : vector<8x16xf32>, vector<8x16xf32> -> vector<16x16xf32>
    %9 = tpu.iota {dimensions = array<i32: 1>} : vector<1x16xi32>
    %10 = vector.broadcast %1 : i32 to vector<1x16xi32>
    %11 = arith.cmpi slt, %9, %10 : vector<1x16xi32>
    %cst = arith.constant -1.000000e+30 : f32
    %12 = vector.shape_cast %11 : vector<1x16xi1> to vector<1x16xi1>
    %13 = vector.broadcast %12 : vector<1x16xi1> to vector<16x16xi1>
    %14 = vector.broadcast %cst : f32 to vector<16x16xf32>
    %15 = arith.select %13, %8, %14 : vector<16x16xi1>, vector<16x16xf32>
    %cst_5 = arith.constant dense<0xFF800000> : vector<16xf32>
    %16 = vector.multi_reduction <maximumf>, %15, %cst_5 [1] : vector<16x16xf32> to vector<16xf32>
    %17 = vector.shape_cast %16 : vector<16xf32> to vector<16x1xf32>
    %18 = vector.broadcast %17 : vector<16x1xf32> to vector<16x16xf32>
    %19 = arith.subf %15, %18 : vector<16x16xf32>
    %20 = math.exp %19 : vector<16x16xf32>
    %cst_6 = arith.constant dense<0.000000e+00> : vector<16xf32>
    %21 = vector.multi_reduction <add>, %20, %cst_6 [1] : vector<16x16xf32> to vector<16xf32>
    %22 = vector.shape_cast %21 : vector<16xf32> to vector<16x1xf32>
    %23 = tpu.reciprocal %22 {approx = true} : vector<16x1xf32> -> vector<16x1xf32>
    %24 = vector.broadcast %23 : vector<16x1xf32> to vector<16x16xf32>
    %25 = arith.mulf %20, %24 : vector<16x16xf32>
    %c0_7 = arith.constant 0 : index
    %c0_8 = arith.constant 0 : index
    %c0_9 = arith.constant 0 : index
    %26 = vector.load %arg3[%c0_7, %c0_8, %c0_9] : memref<1x16x128xf32, #tpu.memory_space<vmem>>, vector<1x16x128xf32>
    %27 = vector.shape_cast %26 : vector<1x16x128xf32> to vector<16x128xf32>
    %cst_10 = arith.constant dense<0.000000e+00> : vector<16x128xf32>
    %28 = tpu.matmul %25, %27, %cst_10 {dimension_numbers = #tpu.dot_dimension_numbers<[1], [0], [0], [1], [0, 0, 1, 1], [], []>} : vector<16x16xf32>, vector<16x128xf32>, vector<16x128xf32> -> vector<16x128xf32>
    %29 = arith.mulf %28, %28 : vector<16x128xf32>
    %cst_11 = arith.constant dense<0.000000e+00> : vector<16xf32>
    %30 = vector.multi_reduction <add>, %29, %cst_11 [1] : vector<16x128xf32> to vector<16xf32>
    %31 = vector.shape_cast %30 : vector<16xf32> to vector<16x1xf32>
    %32 = math.sqrt %31 : vector<16x1xf32>
    %cst_12 = arith.constant 9.99999996E-13 : f32
    %33 = vector.broadcast %cst_12 : f32 to vector<16x1xf32>
    %34 = arith.maximumf %32, %33 : vector<16x1xf32>
    %35 = vector.broadcast %34 : vector<16x1xf32> to vector<16x128xf32>
    %36 = arith.divf %28, %35 : vector<16x128xf32>
    %c0_13 = arith.constant 0 : index
    %c0_14 = arith.constant 0 : index
    %37 = vector.load %arg7[%c0_13, %c0_14] : memref<16x128xf32, #tpu.memory_space<vmem>>, vector<16x128xf32>
    %cst_15 = arith.constant dense<0.000000e+00> : vector<16x16xf32>
    %38 = tpu.matmul %36, %37, %cst_15 {dimension_numbers = #tpu.dot_dimension_numbers<[1], [1], [0], [0], [0, 0, 1, 0], [], []>} : vector<16x128xf32>, vector<16x128xf32>, vector<16x16xf32> -> vector<16x16xf32>
    %39 = vector.extract_strided_slice %38 {offsets = [0, 0], sizes = [8, 16], strides = [1, 1]} : vector<16x16xf32> to vector<8x16xf32>
    %40 = vector.extract_strided_slice %38 {offsets = [8, 0], sizes = [8, 16], strides = [1, 1]} : vector<16x16xf32> to vector<8x16xf32>
    %41 = tpu.iota {dimensions = array<i32: 0>} : vector<8x1xi32>
    %c2_i32 = arith.constant 2 : i32
    %c0_i32 = arith.constant 0 : i32
    %42 = arith.cmpi eq, %c2_i32, %c0_i32 : i32
    %c1_i32 = arith.constant 1 : i32
    %43 = arith.select %42, %c1_i32, %c2_i32 : i32
    %44 = vector.broadcast %43 : i32 to vector<8x1xi32>
    %45 = arith.remsi %41, %44 : vector<8x1xi32>
    %c0_i32_16 = arith.constant 0 : i32
    %46 = vector.broadcast %c0_i32_16 : i32 to vector<8x1xi32>
    %47 = arith.cmpi ne, %45, %46 : vector<8x1xi32>
    %c0_i32_17 = arith.constant 0 : i32
    %48 = vector.broadcast %c0_i32_17 : i32 to vector<8x1xi32>
    %49 = arith.cmpi slt, %45, %48 : vector<8x1xi32>
    %c0_i32_18 = arith.constant 0 : i32
    %50 = arith.cmpi slt, %43, %c0_i32_18 : i32
    %51 = vector.broadcast %50 : i1 to vector<8x1xi1>
    %52 = vector.broadcast %51 : vector<8x1xi1> to vector<8x1xi1>
    %53 = arith.xori %49, %52 : vector<8x1xi1>
    %54 = arith.andi %53, %47 : vector<8x1xi1>
    %55 = vector.broadcast %43 : i32 to vector<8x1xi32>
    %56 = arith.addi %45, %55 : vector<8x1xi32>
    %57 = arith.select %54, %56, %45 : vector<8x1xi1>, vector<8x1xi32>
    %c0_i32_19 = arith.constant 0 : i32
    %58 = vector.broadcast %c0_i32_19 : i32 to vector<8x1xi32>
    %59 = arith.cmpi eq, %57, %58 : vector<8x1xi32>
    %60 = vector.extract_strided_slice %39 {offsets = [0, 0], sizes = [8, 8], strides = [1, 1]} : vector<8x16xf32> to vector<8x8xf32>
    %61 = vector.extract_strided_slice %39 {offsets = [0, 8], sizes = [8, 8], strides = [1, 1]} : vector<8x16xf32> to vector<8x8xf32>
    %62 = vector.shape_cast %59 : vector<8x1xi1> to vector<8x1xi1>
    %63 = vector.broadcast %62 : vector<8x1xi1> to vector<8x8xi1>
    %64 = arith.select %63, %60, %61 : vector<8x8xi1>, vector<8x8xf32>
    %c0_i32_20 = arith.constant 0 : i32
    %65 = vector.broadcast %c0_i32_20 : i32 to vector<8x1xi32>
    %66 = arith.cmpi eq, %57, %65 : vector<8x1xi32>
    %67 = vector.extract_strided_slice %40 {offsets = [0, 0], sizes = [8, 8], strides = [1, 1]} : vector<8x16xf32> to vector<8x8xf32>
    %68 = vector.extract_strided_slice %40 {offsets = [0, 8], sizes = [8, 8], strides = [1, 1]} : vector<8x16xf32> to vector<8x8xf32>
    %69 = vector.shape_cast %66 : vector<8x1xi1> to vector<8x1xi1>
    %70 = vector.broadcast %69 : vector<8x1xi1> to vector<8x8xi1>
    %71 = arith.select %70, %67, %68 : vector<8x8xi1>, vector<8x8xf32>
    %c0_21 = arith.constant 0 : index
    %c0_22 = arith.constant 0 : index
    %c0_23 = arith.constant 0 : index
    %72 = vector.load %arg6[%c0_21, %c0_22, %c0_23] : memref<1x8x8xf32, #tpu.memory_space<vmem>>, vector<1x8x8xf32>
    %73 = vector.shape_cast %72 : vector<1x8x8xf32> to vector<8x8xf32>
    %74 = arith.mulf %64, %73 : vector<8x8xf32>
    %cst_24 = arith.constant dense<0.000000e+00> : vector<8xf32>
    %75 = vector.multi_reduction <add>, %74, %cst_24 [1] : vector<8x8xf32> to vector<8xf32>
    %76 = vector.shape_cast %75 : vector<8xf32> to vector<8x1xf32>
    %77 = arith.mulf %71, %73 : vector<8x8xf32>
    %cst_25 = arith.constant dense<0.000000e+00> : vector<8xf32>
    %78 = vector.multi_reduction <add>, %77, %cst_25 [1] : vector<8x8xf32> to vector<8xf32>
    %79 = vector.shape_cast %78 : vector<8xf32> to vector<8x1xf32>
    %cst_26 = arith.constant 5.000000e-01 : f32
    %80 = vector.broadcast %cst_26 : f32 to vector<8x8xf32>
    %81 = arith.cmpf ogt, %73, %80 : vector<8x8xf32>
    %cst_27 = arith.constant -2.000000e+00 : f32
    %82 = vector.broadcast %cst_27 : f32 to vector<8x8xf32>
    %83 = arith.select %81, %82, %64 : vector<8x8xi1>, vector<8x8xf32>
    %cst_28 = arith.constant dense<0xFF800000> : vector<8xf32>
    %84 = vector.multi_reduction <maximumf>, %83, %cst_28 [1] : vector<8x8xf32> to vector<8xf32>
    %85 = vector.shape_cast %84 : vector<8xf32> to vector<8x1xf32>
    %86 = tpu.iota {dimensions = array<i32: 1>} : vector<8x128xi32>
    %c0_i32_29 = arith.constant 0 : i32
    %87 = vector.broadcast %c0_i32_29 : i32 to vector<8x128xi32>
    %88 = arith.cmpi eq, %86, %87 : vector<8x128xi32>
    %cst_30 = arith.constant 0.000000e+00 : f32
    %89 = vector.shape_cast %76 : vector<8x1xf32> to vector<8x1xf32>
    %90 = vector.broadcast %89 : vector<8x1xf32> to vector<8x128xf32>
    %91 = vector.broadcast %cst_30 : f32 to vector<8x128xf32>
    %92 = arith.select %88, %90, %91 : vector<8x128xi1>, vector<8x128xf32>
    %c1_i32_31 = arith.constant 1 : i32
    %93 = vector.broadcast %c1_i32_31 : i32 to vector<8x128xi32>
    %94 = arith.cmpi eq, %86, %93 : vector<8x128xi32>
    %cst_32 = arith.constant 0.000000e+00 : f32
    %95 = vector.shape_cast %79 : vector<8x1xf32> to vector<8x1xf32>
    %96 = vector.broadcast %95 : vector<8x1xf32> to vector<8x128xf32>
    %97 = vector.broadcast %cst_32 : f32 to vector<8x128xf32>
    %98 = arith.select %94, %96, %97 : vector<8x128xi1>, vector<8x128xf32>
    %99 = arith.addf %92, %98 : vector<8x128xf32>
    %c2_i32_33 = arith.constant 2 : i32
    %100 = vector.broadcast %c2_i32_33 : i32 to vector<8x128xi32>
    %101 = arith.cmpi eq, %86, %100 : vector<8x128xi32>
    %cst_34 = arith.constant 0.000000e+00 : f32
    %102 = vector.shape_cast %85 : vector<8x1xf32> to vector<8x1xf32>
    %103 = vector.broadcast %102 : vector<8x1xf32> to vector<8x128xf32>
    %104 = vector.broadcast %cst_34 : f32 to vector<8x128xf32>
    %105 = arith.select %101, %103, %104 : vector<8x128xi1>, vector<8x128xf32>
    %106 = arith.addf %99, %105 : vector<8x128xf32>
    %c0_35 = arith.constant 0 : index
    %c0_36 = arith.constant 0 : index
    %c0_37 = arith.constant 0 : index
    %107 = vector.load %arg8[%c0_35, %c0_36, %c0_37] : memref<1x8x128xf32, #tpu.memory_space<vmem>>, vector<1x8x128xf32>
    %108 = vector.shape_cast %107 : vector<1x8x128xf32> to vector<8x128xf32>
    %109 = vector.shape_cast %106 : vector<8x128xf32> to vector<1x8x128xf32>
    tpu.vector_store %arg8[%c0_35, %c0_36, %c0_37], %109 {strides = array<i32>} : memref<1x8x128xf32, #tpu.memory_space<vmem>>, vector<1x8x128xf32>,
    return
  }
  func.func @transform_0(%arg0: i32, %arg1: memref<8xi32, #tpu.memory_space<smem>>, %arg2: memref<8xi32, #tpu.memory_space<smem>>) -> (i32, i32, i32) {
    %0 = arith.index_cast %arg0 : i32 to index
    %1 = memref.load %arg1[%0] : memref<8xi32, #tpu.memory_space<smem>>
    %c0_i32 = arith.constant 0 : i32
    %c0_i32_0 = arith.constant 0 : i32
    %c0_i32_1 = arith.constant 0 : i32
    return %1, %c0_i32, %c0_i32_0 : i32, i32, i32
  }
  func.func @transform_1(%arg0: i32, %arg1: memref<8xi32, #tpu.memory_space<smem>>, %arg2: memref<8xi32, #tpu.memory_space<smem>>) -> (i32, i32, i32) {
    %c0_i32 = arith.constant 0 : i32
    %c0_i32_0 = arith.constant 0 : i32
    %c0_i32_1 = arith.constant 0 : i32
    return %arg0, %c0_i32, %c0_i32_0 : i32, i32, i32
  }
  func.func @transform_2(%arg0: i32, %arg1: memref<8xi32, #tpu.memory_space<smem>>, %arg2: memref<8xi32, #tpu.memory_space<smem>>) -> (i32, i32, i32) {
    %c0_i32 = arith.constant 0 : i32
    %c0_i32_0 = arith.constant 0 : i32
    %c0_i32_1 = arith.constant 0 : i32
    return %arg0, %c0_i32, %c0_i32_0 : i32, i32, i32
  }
  func.func @transform_3(%arg0: i32, %arg1: memref<8xi32, #tpu.memory_space<smem>>, %arg2: memref<8xi32, #tpu.memory_space<smem>>) -> (i32, i32, i32) {
    %c0_i32 = arith.constant 0 : i32
    %c0_i32_0 = arith.constant 0 : i32
    %c0_i32_1 = arith.constant 0 : i32
    return %arg0, %c0_i32, %c0_i32_0 : i32, i32, i32
  }
  func.func @transform_4(%arg0: i32, %arg1: memref<8xi32, #tpu.memory_space<smem>>, %arg2: memref<8xi32, #tpu.memory_space<smem>>) -> (i32, i32) {
    %c0_i32 = arith.constant 0 : i32
    %c0_i32_0 = arith.constant 0 : i32
    %c0_i32_1 = arith.constant 0 : i32
    return %c0_i32, %c0_i32_0 : i32, i32
  }
  func.func @transform_5(%arg0: i32, %arg1: memref<8xi32, #tpu.memory_space<smem>>, %arg2: memref<8xi32, #tpu.memory_space<smem>>) -> (i32, i32, i32) {
    %c0_i32 = arith.constant 0 : i32
    %c0_i32_0 = arith.constant 0 : i32
    %c0_i32_1 = arith.constant 0 : i32
    return %arg0, %c0_i32, %c0_i32_0 : i32, i32, i32
  }
}

</mosaic_0001>

<llo_original>
// kernel: tpu_custom_call.1
$region0: #{tpu_custom_call.1}
  #allocation0 [shape = 'u32[]', space=smem, size = 0x4, offset = 0x4, fixed_abs, tag = 'smem constant byte address 0x4 - core index']
  #allocation1 [shape = 'u32[72,128]{1,0:T(1,128)}', space=vmem, size = 0x9000, scoped, tag = 'internal scratch']
  #allocation2 [shape = 's32[1]{0}', space=sflag, size = 0x4, scoped, tag = 'scoped memory for tpu_custom_call.1']
  #allocation3 [shape = 'u8[512]{0}', space=smem, size = 0x200, scoped, tag = 'prefetched SMEM operand 0']
  #allocation4 [shape = 'u8[512]{0}', space=smem, size = 0x200, scoped, tag = 'prefetched SMEM operand 1']
  %s0 = inlined_call_operand.vmem [shape: s32[8], index: 0, kind: input, shape index: {}]
  %s1 = inlined_call_operand.vmem [shape: s32[8], index: 1, kind: input, shape index: {}]
  %s2 = inlined_call_operand.vmem [shape: f32[4,16,128], index: 2, kind: input, shape index: {}]
  %s3 = inlined_call_operand.hbm [shape: f32[8,8,16], index: 3, kind: input, shape index: {}]
  %s4 = inlined_call_operand.vmem [shape: f32[8,8,1], index: 4, kind: input, shape index: {}]
  %s5 = inlined_call_operand.hbm [shape: f32[8,8,8], index: 5, kind: input, shape index: {}]
  %s6 = inlined_call_operand.hbm [shape: f32[16,128], index: 6, kind: input, shape index: {}]
  %s7 = inlined_call_operand.hbm [shape: f32[8,8,128], index: 7, kind: output, shape index: {}]
  %s8 = sld [smem:[#allocation0]]
  $region65: #{tpu_custom_call.1} parent=0
    _
  %s10 = ssub.s32 1, %s8
  %s11 = scalar_select 0, %s10, %s8
  %s13 = sshll.u32 %s0, 4
  %s14 = int_to_ptr.vmem [resolvable:$true] %s13
  %16 = dma.vmem_to_smem %s14, 16, [#allocation3], [#allocation2]
  %s18 = sshll.u32 %s1, 4
  %s19 = int_to_ptr.vmem [resolvable:$true] %s18
  %21 = dma.vmem_to_smem %s19, 16, [#allocation4], [#allocation2]
  %23 = dma.done [#allocation2], 32
  %24 = sfence
  $region1: #{tpu_custom_call.1} parent=0
    #allocation5 [shape = 'u8[8192]{0}', space=vmem, size = 0x2000, scoped, tag = 'input window, operand 3']
    #allocation6 [shape = 's32[2]{0}', space=sflag, size = 0x8, scoped, tag = 'scoped memory for tpu_custom_call.1']
    #allocation7 [shape = 's32[2]{0}', space=sflag, size = 0x8, scoped, tag = 'scoped memory for tpu_custom_call.1']
    #allocation8 [shape = 'u8[8192]{0}', space=vmem, size = 0x2000, scoped, tag = 'input window, operand 5']
    #allocation9 [shape = 's32[2]{0}', space=sflag, size = 0x8, scoped, tag = 'scoped memory for tpu_custom_call.1']
    #allocation10 [shape = 'u8[8192]{0}', space=vmem, size = 0x2000, scoped, tag = 'input window, operand 6, single buffered']
    #allocation11 [shape = 'u8[8192]{0}', space=vmem, size = 0x2000, scoped, tag = 'output window, operand 0']
    %25 = vsyncpa [#allocation6], 0
    %s26 = scalar_lea.sflag [#allocation6], 1
    %27 = vsyncpa %s26, 0
    %28 = vsyncpa [#allocation9], 0
    %s29 = scalar_lea.sflag [#allocation9], 1
    %30 = vsyncpa %s29, 0
    %31 = vsyncpa [#allocation7], 0
    %s32 = scalar_lea.sflag [#allocation7], 1
    %33 = vsyncpa %s32, 0
    loop: start=0, step=1, limit=10
    $region2: #{tpu_custom_call.1} parent=1 // loop_pre_header
      _
    $region3: #{tpu_custom_call.1} parent=1 // loop_header
      %s35 = sphi 0, %s39
      %p36 = scmp.ge.s32.totalorder %s35, 10
      %s47 = sphi 0, %s49
      %s50 = sphi 0, %s47
      %s51 = sphi 0, %s50
      %s67 = sphi 0, %s51
      %s73 = sphi 0, %s75
      %s76 = sphi 0, %s73
      %s77 = sphi 0, %s76
      %s93 = sphi 0, %s77
      %s99 = sphi 0, %s101
      %s102 = sphi 0, %s99
      %s103 = sphi 0, %s102
      %s119 = sphi 0, %s103
      %s125 = sphi 0, %s127
      %s128 = sphi 0, %s125
      %s129 = sphi 0, %s128
      %s145 = sphi 0, %s129
      %s149 = sphi 0, %s149
      %s151 = sphi 0, %s149
      %s152 = sphi 0, %s151
      %s166 = sphi 0, %s152
      %s172 = sphi 0, %s174
      %s175 = sphi 0, %s172
      %s176 = sphi 0, %s175
      %s192 = sphi 0, %s176
    $region4: #{tpu_custom_call.1} parent=1 // loop_header_branch
      %38 = sbr.rel (%p36) target = $region8
    $region5: #{tpu_custom_call.1} parent=1 // loop_body
      %s40 = ssub.s32 %s35, 1
      %s41 = ssub.s32 %s35, 2
      %s42 = sadd.s32 %s35, 1
      %s43 = sld [smem:[#allocation3 + %s35]]
      %s44 = sld [smem:[#allocation3 + %s42]]
      %s45 = ssub.s32 %s43, %s44
      %p46 = scmp.eq.s32.totalorder %s45, 0
      %s48 = sadd.s32 %s47, 1
      %s49 = scalar_select %p46, %s47, %s48
      %p52 = pneg %p46
      %p53 = scmp.eq.s32.totalorder %s35, 7
      %p54 = por %p52, %p53
      %p55 = scmp.ne.s32.totalorder %s47, %s50
      %p56 = scmp.eq.s32.totalorder %s35, 0
      %p57 = por %p55, %p56
      %p58 = scmp.ne.s32.totalorder %s47, %s50
      %p59 = scmp.eq.s32.totalorder %s40, 7
      %p60 = por %p58, %p59
      %p61 = scmp.ne.s32.totalorder %s50, %s51
      %p62 = scmp.eq.s32.totalorder %s40, 0
      %p63 = por %p61, %p62
      %p64 = scmp.ne.s32.totalorder %s50, %s51
      %p65 = scmp.eq.s32.totalorder %s41, 7
      %p66 = por %p64, %p65
      %p68 = scmp.ne.s32.totalorder %s51, %s67
      %p69 = scmp.eq.s32.totalorder %s41, 0
      %p70 = por %p68, %p69
      %s71 = ssub.s32 %s35, %s42
      %p72 = scmp.eq.s32.totalorder %s71, 0
      %s74 = sadd.s32 %s73, 1
      %s75 = scalar_select %p72, %s73, %s74
      %p78 = pneg %p72
      %p79 = scmp.eq.s32.totalorder %s35, 7
      %p80 = por %p78, %p79
      %p81 = scmp.ne.s32.totalorder %s73, %s76
      %p82 = scmp.eq.s32.totalorder %s35, 0
      %p83 = por %p81, %p82
      %p84 = scmp.ne.s32.totalorder %s73, %s76
      %p85 = scmp.eq.s32.totalorder %s40, 7
      %p86 = por %p84, %p85
      %p87 = scmp.ne.s32.totalorder %s76, %s77
      %p88 = scmp.eq.s32.totalorder %s40, 0
      %p89 = por %p87, %p88
      %p90 = scmp.ne.s32.totalorder %s76, %s77
      %p91 = scmp.eq.s32.totalorder %s41, 7
      %p92 = por %p90, %p91
      %p94 = scmp.ne.s32.totalorder %s77, %s93
      %p95 = scmp.eq.s32.totalorder %s41, 0
      %p96 = por %p94, %p95
      %s97 = ssub.s32 %s35, %s42
      %p98 = scmp.eq.s32.totalorder %s97, 0
      %s100 = sadd.s32 %s99, 1
      %s101 = scalar_select %p98, %s99, %s100
      %p104 = pneg %p98
      %p105 = scmp.eq.s32.totalorder %s35, 7
      %p106 = por %p104, %p105
      %p107 = scmp.ne.s32.totalorder %s99, %s102
      %p108 = scmp.eq.s32.totalorder %s35, 0
      %p109 = por %p107, %p108
      %p110 = scmp.ne.s32.totalorder %s99, %s102
      %p111 = scmp.eq.s32.totalorder %s40, 7
      %p112 = por %p110, %p111
      %p113 = scmp.ne.s32.totalorder %s102, %s103
      %p114 = scmp.eq.s32.totalorder %s40, 0
      %p115 = por %p113, %p114
      %p116 = scmp.ne.s32.totalorder %s102, %s103
      %p117 = scmp.eq.s32.totalorder %s41, 7
      %p118 = por %p116, %p117
      %p120 = scmp.ne.s32.totalorder %s103, %s119
      %p121 = scmp.eq.s32.totalorder %s41, 0
      %p122 = por %p120, %p121
      %s123 = ssub.s32 %s35, %s42
      %p124 = scmp.eq.s32.totalorder %s123, 0
      %s126 = sadd.s32 %s125, 1
      %s127 = scalar_select %p124, %s125, %s126
      %p130 = pneg %p124
      %p131 = scmp.eq.s32.totalorder %s35, 7
      %p132 = por %p130, %p131
      %p133 = scmp.ne.s32.totalorder %s125, %s128
      %p134 = scmp.eq.s32.totalorder %s35, 0
      %p135 = por %p133, %p134
      %p136 = scmp.ne.s32.totalorder %s125, %s128
      %p137 = scmp.eq.s32.totalorder %s40, 7
      %p138 = por %p136, %p137
      %p139 = scmp.ne.s32.totalorder %s128, %s129
      %p140 = scmp.eq.s32.totalorder %s40, 0
      %p141 = por %p139, %p140
      %p142 = scmp.ne.s32.totalorder %s128, %s129
      %p143 = scmp.eq.s32.totalorder %s41, 7
      %p144 = por %p142, %p143
      %p146 = scmp.ne.s32.totalorder %s129, %s145
      %p147 = scmp.eq.s32.totalorder %s41, 0
      %p148 = por %p146, %p147
      %s150 = sadd.s32 %s149, 1
      %p153 = scmp.eq.s32.totalorder %s35, 7
      %p154 = scmp.ne.s32.totalorder %s149, %s151
      %p155 = scmp.eq.s32.totalorder %s35, 0
      %p156 = por %p154, %p155
      %p157 = scmp.ne.s32.totalorder %s149, %s151
      %p158 = scmp.eq.s32.totalorder %s40, 7
      %p159 = por %p157, %p158
      %p160 = scmp.ne.s32.totalorder %s151, %s152
      %p161 = scmp.eq.s32.totalorder %s40, 0
      %p162 = por %p160, %p161
      %p163 = scmp.ne.s32.totalorder %s151, %s152
      %p164 = scmp.eq.s32.totalorder %s41, 7
      %p165 = por %p163, %p164
      %p167 = scmp.ne.s32.totalorder %s152, %s166
      %p168 = scmp.eq.s32.totalorder %s41, 0
      %p169 = por %p167, %p168
      %s170 = ssub.s32 %s35, %s42
      %p171 = scmp.eq.s32.totalorder %s170, 0
      %s173 = sadd.s32 %s172, 1
      %s174 = scalar_select %p171, %s172, %s173
      %p177 = pneg %p171
      %p178 = scmp.eq.s32.totalorder %s35, 7
      %p179 = por %p177, %p178
      %p180 = scmp.ne.s32.totalorder %s172, %s175
      %p181 = scmp.eq.s32.totalorder %s35, 0
      %p182 = por %p180, %p181
      %p183 = scmp.ne.s32.totalorder %s172, %s175
      %p184 = scmp.eq.s32.totalorder %s40, 7
      %p185 = por %p183, %p184
      %p186 = scmp.ne.s32.totalorder %s175, %s176
      %p187 = scmp.eq.s32.totalorder %s40, 0
      %p188 = por %p186, %p187
      %p189 = scmp.ne.s32.totalorder %s175, %s176
      %p190 = scmp.eq.s32.totalorder %s41, 7
      %p191 = por %p189, %p190
      %p193 = scmp.ne.s32.totalorder %s176, %s192
      %p194 = scmp.eq.s32.totalorder %s41, 0
      %p195 = por %p193, %p194
      %p196 = scmp.le.s32.totalorder 1, %s35
      %p197 = scmp.lt.s32.totalorder %s35, 9
      %p198 = pnand %p196, %p197
      %p199 = pneg %p198
      // Predicated region
      $region9: #{tpu_custom_call.1} parent=5 // pred_check
        _
      $region10: #{tpu_custom_call.1} parent=5 // pred_check_branch
        %201 = sbr.rel (%p198) target = $region12
      $region11: #{tpu_custom_call.1} parent=5 // pred_region
        %s202 = ssub.s32 %s35, 1
        // Predicated region
        $region13: #{tpu_custom_call.1} parent=11 // pred_check
          %p203 = pneg %p162
        $region14: #{tpu_custom_call.1} parent=11 // pred_check_branch
          %205 = sbr.rel (%p203) target = $region16
        $region15: #{tpu_custom_call.1} parent=11 // pred_region
          %207 = vsyncadd [#allocation9], 0
          %s208 = sshll.u32 %s6, 4
          %s209 = int_to_ptr.hbm [resolvable:$true] %s208
          %s210 = sshll.u32 [#allocation10], 4
          %s211 = int_to_ptr.vmem [resolvable:$true] %s210
          %216 = dma.hbm_to_vmem [thread:$0]  %s209, 256, %s211, [#allocation9], 128, 128, 8
        $region16: #{tpu_custom_call.1} parent=11 // pred_fallthru
          _
      $region12: #{tpu_custom_call.1} parent=5 // pred_fallthru
        _
      %p217 = scmp.lt.s32.totalorder %s35, 8
      // Predicated region
      $region17: #{tpu_custom_call.1} parent=5 // pred_check
        %p218 = pneg %p217
      $region18: #{tpu_custom_call.1} parent=5 // pred_check_branch
        %220 = sbr.rel (%p218) target = $region20
      $region19: #{tpu_custom_call.1} parent=5 // pred_region
        // Predicated region
        $region21: #{tpu_custom_call.1} parent=19 // pred_check
          %p221 = pneg %p57
        $region22: #{tpu_custom_call.1} parent=19 // pred_check_branch
          %223 = sbr.rel (%p221) target = $region24
        $region23: #{tpu_custom_call.1} parent=19 // pred_region
          %s224 = sld [smem:[#allocation3 + %s35]]
          %p225 = scmp.lt.s32.totalorder %s224, 3
          %s226 = scalar_select %p225, %s224, 3
          %s227 = smul.addr %s226, 2
          %s228 = smul.addr %s227, 8
          %s229 = scalar_lea.vmem %s2, %s228
          %s230 = sld [smem:[#allocation3 + %s35]]
        $region24: #{tpu_custom_call.1} parent=19 // pred_fallthru
          _
        // Predicated region
        $region25: #{tpu_custom_call.1} parent=19 // pred_check
          %p231 = pneg %p83
        $region26: #{tpu_custom_call.1} parent=19 // pred_check_branch
          %233 = sbr.rel (%p231) target = $region28
        $region27: #{tpu_custom_call.1} parent=19 // pred_region
          %s234 = sand.u32 %s73, 1
          %s235 = scalar_lea.sflag [#allocation6], %s234
          %s236 = sand.u32 %s73, 1
          %s237 = smul.addr %s236, 8
          %s238 = scalar_lea.vmem [#allocation5], %s237
          %240 = vsyncadd %s235, 0
          %s241 = smul.addr %s35, 8
          %s242 = scalar_lea.hbm %s3, %s241
          %s244 = sshll.u32 %s242, 4
          %s245 = int_to_ptr.hbm [resolvable:$true] %s244
          %s246 = sshll.u32 %s238, 4
          %s247 = int_to_ptr.vmem [resolvable:$true] %s246
          %249 = dma.hbm_to_vmem [thread:$0]  %s245, 128, %s247, %s235
        $region28: #{tpu_custom_call.1} parent=19 // pred_fallthru
          _
        // Predicated region
        $region29: #{tpu_custom_call.1} parent=19 // pred_check
          %p250 = pneg %p109
        $region30: #{tpu_custom_call.1} parent=19 // pred_check_branch
          %252 = sbr.rel (%p250) target = $region32
        $region31: #{tpu_custom_call.1} parent=19 // pred_region
          %p253 = scmp.lt.s32.totalorder %s35, 7
          %s254 = scalar_select %p253, %s35, 7
          %s255 = smul.addr %s254, 8
          %s256 = scalar_lea.vmem %s4, %s255
        $region32: #{tpu_custom_call.1} parent=19 // pred_fallthru
          _
        // Predicated region
        $region33: #{tpu_custom_call.1} parent=19 // pred_check
          %p257 = pneg %p135
        $region34: #{tpu_custom_call.1} parent=19 // pred_check_branch
          %259 = sbr.rel (%p257) target = $region36
        $region35: #{tpu_custom_call.1} parent=19 // pred_region
          %s260 = sand.u32 %s35, 1
          %s261 = scalar_lea.sflag [#allocation9], %s260
          %s262 = sand.u32 %s125, 1
          %s263 = smul.addr %s262, 8
          %s264 = scalar_lea.vmem [#allocation8], %s263
          %266 = vsyncadd %s261, 0
          %s267 = smul.addr %s35, 8
          %s268 = scalar_lea.hbm %s5, %s267
          %s270 = sshll.u32 %s268, 4
          %s271 = int_to_ptr.hbm [resolvable:$true] %s270
          %s272 = sshll.u32 %s264, 4
          %s273 = int_to_ptr.vmem [resolvable:$true] %s272
          %275 = dma.hbm_to_vmem [thread:$0]  %s271, 128, %s273, %s261
        $region36: #{tpu_custom_call.1} parent=19 // pred_fallthru
          _
      $region20: #{tpu_custom_call.1} parent=5 // pred_fallthru
        _
      %p276 = scmp.le.s32.totalorder 1, %s35
      %p277 = scmp.lt.s32.totalorder %s35, 9
      %p278 = pnand %p276, %p277
      %p279 = pneg %p278
      // Predicated region
      $region37: #{tpu_custom_call.1} parent=5 // pred_check
        _
      $region38: #{tpu_custom_call.1} parent=5 // pred_check_branch
        %281 = sbr.rel (%p278) target = $region40
      $region39: #{tpu_custom_call.1} parent=5 // pred_region
        %s282 = ssub.s32 %s35, 1
        %s283 = sand.u32 %s76, 1
        %s284 = scalar_lea.sflag [#allocation6], %s283
        %s285 = sand.u32 %s76, 1
        %s286 = smul.addr %s285, 8
        %s287 = scalar_lea.vmem [#allocation5], %s286
        // Predicated region
        $region41: #{tpu_custom_call.1} parent=39 // pred_check
          %p288 = pneg %p89
        $region42: #{tpu_custom_call.1} parent=39 // pred_check_branch
          %290 = sbr.rel (%p288) target = $region44
        $region43: #{tpu_custom_call.1} parent=39 // pred_region
          %292 = dma.done %s284, 128
        $region44: #{tpu_custom_call.1} parent=39 // pred_fallthru
          _
        %s293 = sand.u32 %s40, 1
        %s294 = scalar_lea.sflag [#allocation9], %s293
        %s295 = sand.u32 %s128, 1
        %s296 = smul.addr %s295, 8
        %s297 = scalar_lea.vmem [#allocation8], %s296
        // Predicated region
        $region45: #{tpu_custom_call.1} parent=39 // pred_check
          %p298 = pneg %p141
        $region46: #{tpu_custom_call.1} parent=39 // pred_check_branch
          %300 = sbr.rel (%p298) target = $region48
        $region47: #{tpu_custom_call.1} parent=39 // pred_region
          %302 = dma.done %s294, 128
        $region48: #{tpu_custom_call.1} parent=39 // pred_fallthru
          _
        // Predicated region
        $region49: #{tpu_custom_call.1} parent=39 // pred_check
          %p303 = pneg %p162
        $region50: #{tpu_custom_call.1} parent=39 // pred_check_branch
          %305 = sbr.rel (%p303) target = $region52
        $region51: #{tpu_custom_call.1} parent=39 // pred_region
          %307 = dma.done [#allocation9], 256
        $region52: #{tpu_custom_call.1} parent=39 // pred_fallthru
          _
        %s308 = sld [smem:[#allocation3 + %s40]]
        %p309 = scmp.lt.s32.totalorder %s308, 3
        %s310 = scalar_select %p309, %s308, 3
        %s311 = smul.addr %s310, 2
        %s312 = smul.addr %s311, 8
        %s313 = scalar_lea.vmem %s2, %s312
        %p314 = pneg %p63
        %p315 = pneg %p60
        %s316 = sand.u32 %s76, 1
        %s317 = scalar_lea.sflag [#allocation6], %s316
        %s318 = sand.u32 %s76, 1
        %s319 = smul.addr %s318, 8
        %s320 = scalar_lea.vmem [#allocation5], %s319
        %p321 = pneg %p89
        %p322 = pneg %p86
        %p323 = scmp.lt.s32.totalorder %s40, 7
        %s324 = scalar_select %p323, %s40, 7
        %s325 = smul.addr %s324, 8
        %s326 = scalar_lea.vmem %s4, %s325
        %p327 = pneg %p115
        %p328 = pneg %p112
        %s329 = sand.u32 %s40, 1
        %s330 = scalar_lea.sflag [#allocation9], %s329
        %s331 = sand.u32 %s128, 1
        %s332 = smul.addr %s331, 8
        %s333 = scalar_lea.vmem [#allocation8], %s332
        %p334 = pneg %p141
        %p335 = pneg %p138
        %p336 = pneg %p162
        %p337 = pneg %p159
        %p338 = pneg %p188
        %p339 = pneg %p185
        %s340 = sand.u32 %s175, 1
        %s341 = scalar_lea.sflag [#allocation7], %s340
        %s342 = sand.u32 %s175, 1
        %s343 = smul.addr %s342, 8
        %s344 = scalar_lea.vmem [#allocation11], %s343
        %s345 = sld [smem:[#allocation3 + %s40]]
        %p346 = scmp.lt.s32.totalorder %s345, 3
        %s347 = scalar_select %p346, %s345, 3
        %s348 = smul.addr %s347, 2
        %s349 = smul.addr %s348, 8
        %s350 = scalar_lea.vmem %s2, %s349
        %s351 = sld [smem:[#allocation3 + %s40]]
        %p352 = scmp.lt.s32.totalorder %s40, 7
        %s353 = scalar_select %p352, %s40, 7
        %s354 = smul.addr %s353, 8
        %s355 = scalar_lea.vmem %s4, %s354
        %s356 = sld [smem:[#allocation4 + %s40]]
        %v357 = vld [vmem:[%s287] sm:$0xff]
        %v358 = vld [vmem:[%s355] sm:$0xff]
        %360 = vset.pattern.permute.xlu0 0
        %361 = vperm.xlu0 %360, %v358
        %v362 = vpop.permute.xlu0 %361
        %v364 = vmul.f32 %v357, %v362
        %v365 = vlaneseq
        %v366 = vand.u32 %v365, 127
        %v367 = vstv %s356
        %vm368 = vcmp.lt.s32.totalorder %v366, %v367
        %v369 = vsel %vm368, 1, 0
        %vm370 = vcmp.eq.s32.totalorder %v369, 1
        %v371 = vsel %vm370, %v357, -1e+30
        %v372 = vsel %vm370, %v364, -1e+30
        %vm373 = vcmask 130048
        %v374 = vsel %vm373, %v371, -inf
        %375 = vmax.xlane.f32.xlu0 %v374
        %v376 = vpop.xlane.xlu0 %375
        %v377 = vsel %vm373, %v372, -inf
        %378 = vmax.xlane.f32.xlu0 %v377
        %v379 = vpop.xlane.xlu0 %378
        %v380 = vsub.f32 %v371, %v376
        %v381 = vsub.f32 %v372, %v379
        %v382 = vmul.f32 %v380, 1.442695
        %v383 = vpow.pop %v382
        %v384 = vmul.f32 %v381, 1.442695
        %v385 = vpow.pop %v384
        %v386 = vsel %vm373, %v383, 0.0
        %387 = vadd.xlane.f32.xlu0 %v386
        %v388 = vpop.xlane.xlu0 %387
        %v389 = vsel %vm373, %v385, 0.0
        %390 = vadd.xlane.f32.xlu0 %v389
        %v391 = vpop.xlane.xlu0 %390
        %v392 = vrcp.pop %v388
        %v393 = vrcp.pop %v391
        %v394 = vmul.f32 %v383, %v392
        %v395 = vmul.f32 %v385, %v393
        %v396 = vld [vmem:[%s350] sm:$0xff]
        %v397 = vld [vmem:[%s350 + $0x8] sm:$0xff]
        %v399 = vsel %vm373, %v394, 0
        %v402 = vsel %vm373, %v395, 0
        %404 = vmatpush.msra.mxu0 0.0
        %405 = vmatpush.msra.mxu0 0.0
        %406 = vmatpush.msra.mxu0 0.0
        %407 = vmatpush.msra.mxu0 0.0
        %408 = vmatpush.msra.mxu0 0.0
        %409 = vmatpush.msra.mxu0 0.0
        %410 = vmatpush.msra.mxu0 0.0
        %411 = vmatpush.msra.mxu0 0.0
        %412 = vmatpush.msra.mxu0 0.0
        %413 = vmatpush.msra.mxu0 0.0
        %414 = vmatpush.msra.mxu0 0.0
        %415 = vmatpush.msra.mxu0 0.0
        %416 = vmatpush.msra.mxu0 0.0
        %417 = vmatpush.msra.mxu0 0.0
        %418 = vmatpush.msra.mxu0 %v397
        %419 = vmatpush.msra.mxu0 %v396
        %420 = vmatmul.f32.gmra.mxu0 %v399
        %v421 = vpop.f32.mrf.mxu0
        %v422 = vadd.f32 0.0, %v421
        %423 = vmatmul.f32.gmra.mxu0 %v402
        %v424 = vpop.f32.mrf.mxu0
        %v425 = vadd.f32 0.0, %v424
        %426 = vdwg.mxu0
        %v427 = vmul.f32 %v422, %v422
        %v428 = vmul.f32 %v425, %v425
        %429 = vadd.xlane.f32.xlu0 %v427
        %v430 = vpop.xlane.xlu0 %429
        %431 = vadd.xlane.f32.xlu0 %v428
        %v432 = vpop.xlane.xlu0 %431
        %v433 = vrsqrt.pop %v430
        %v434 = vmul.f32 %v433, %v430
        %v435 = vmul.f32 %v434, %v433
        %v436 = vmul.f32 0.5, %v435
        %v437 = vsub.f32 1.5, %v436
        %v438 = vmul.f32 %v433, %v437
        %v439 = vmul.f32 %v430, %v438
        %vm440 = vcmp.eq.f32.partialorder %v430, inf
        %v441 = vsel %vm440, %v430, %v439
        %vm442 = vcmp.eq.f32.partialorder %v430, 0.0
        %v443 = vand.u32 %v430, 2147483648
        %v444 = vsel %vm442, %v443, %v441
        %v445 = vrsqrt.pop %v432
        %v446 = vmul.f32 %v445, %v432
        %v447 = vmul.f32 %v446, %v445
        %v448 = vmul.f32 0.5, %v447
        %v449 = vsub.f32 1.5, %v448
        %v450 = vmul.f32 %v445, %v449
        %v451 = vmul.f32 %v432, %v450
        %vm452 = vcmp.eq.f32.partialorder %v432, inf
        %v453 = vsel %vm452, %v432, %v451
        %vm454 = vcmp.eq.f32.partialorder %v432, 0.0
        %v455 = vand.u32 %v432, 2147483648
        %v456 = vsel %vm454, %v455, %v453
        %v457 = vmax.f32 %v444, 1e-12
        %v458 = vmax.f32 %v456, 1e-12
        %v459 = vrcp.pop %v457
        %v460 = vmul.f32 %v457, %v459
        %v461 = vsub.f32 1.0, %v460
        %v462 = vmul.f32 %v459, %v461
        %v463 = vadd.f32 %v459, %v462
        %vm464 = vweird.f32 %v457
        %vm465 = vweird.f32 %v459
        %vm466 = vmor %vm464, %vm465
        %v467 = vsel %vm466, %v459, %v463
        %v468 = vand.u32 2147483647, %v457
        %vm469 = vcmp.eq.f32.partialorder %v468, 8.507059e+37
        %v470 = vand.u32 %v457, 2147483648
        %v471 = vor.u32 1.1754944e-38, %v470
        %v472 = vsel %vm469, %v471, %v467
        %v473 = vmul.f32 %v422, %v472
        %v474 = vrcp.pop %v458
        %v475 = vmul.f32 %v458, %v474
        %v476 = vsub.f32 1.0, %v475
        %v477 = vmul.f32 %v474, %v476
        %v478 = vadd.f32 %v474, %v477
        %vm479 = vweird.f32 %v458
        %vm480 = vweird.f32 %v474
        %vm481 = vmor %vm479, %vm480
        %v482 = vsel %vm481, %v474, %v478
        %v483 = vand.u32 2147483647, %v458
        %vm484 = vcmp.eq.f32.partialorder %v483, 8.507059e+37
        %v485 = vand.u32 %v458, 2147483648
        %v486 = vor.u32 1.1754944e-38, %v485
        %v487 = vsel %vm484, %v486, %v482
        %v488 = vmul.f32 %v425, %v487
        %v489 = vld [vmem:[#allocation10] sm:$0xff]
        %v490 = vld [vmem:[#allocation10 + $0x8] sm:$0xff]
        %491 = vmatpush.xpose.msra.mxu0 0.0
        %492 = vmatpush.xpose.msra.mxu0 0.0
        %493 = vmatpush.xpose.msra.mxu0 0.0
        %494 = vmatpush.xpose.msra.mxu0 0.0
        %495 = vmatpush.xpose.msra.mxu0 0.0
        %496 = vmatpush.xpose.msra.mxu0 0.0
        %497 = vmatpush.xpose.msra.mxu0 0.0
        %498 = vmatpush.xpose.msra.mxu0 0.0
        %499 = vmatpush.xpose.msra.mxu0 0.0
        %500 = vmatpush.xpose.msra.mxu0 0.0
        %501 = vmatpush.xpose.msra.mxu0 0.0
        %502 = vmatpush.xpose.msra.mxu0 0.0
        %503 = vmatpush.xpose.msra.mxu0 0.0
        %504 = vmatpush.xpose.msra.mxu0 0.0
        %505 = vmatpush.xpose.msra.mxu0 %v490
        %506 = vmatpush.xpose.msra.mxu0 %v489
        %507 = vmatmul.f32.gmra.mxu0 %v473
        %v508 = vpop.f32.mrf.mxu0
        %v509 = vadd.f32 0.0, %v508
        %510 = vmatmul.f32.gmra.mxu0 %v488
        %v511 = vpop.f32.mrf.mxu0
        %v512 = vadd.f32 0.0, %v511
        %513 = vdwg.mxu0
        %v514 = vlaneseq
        %v515 = vshrl.u32 %v514, 7
        %vm516 = vcmp.lt.s32.totalorder %v515, 0
        %v517 = vsub.s32 0, %v515
        %v518 = vsel %vm516, %v517, %v515
        %v519 = vshrl.u32 %v518, 1
        %v520 = vand.u32 %v518, 1
        %v521 = vsub.s32 0, %v520
        %v522 = vsel %vm516, %v521, %v520
        %vm523 = vcmp.ne.s32.totalorder %v522, 0
        %vm524 = vcmp.lt.s32.totalorder %v522, 0
        %vm525 = vmand %vm524, %vm523
        %v526 = vadd.s32 %v522, 2
        %v527 = vsel %vm525, %v526, %v522
        %vm528 = vcmp.eq.s32.totalorder %v527, 0
        %v529 = vsel %vm528, 1, 0
        %vm530 = vcmp.eq.s32.totalorder %v529, 1
        %532 = vrot.lane.b32.xlu0 %v509, 120
        %v533 = vpop.permute.xlu0 %532
        %v535 = vsel %vm530, %v509, %v533
        %537 = vrot.lane.b32.xlu0 %v512, 120
        %v538 = vpop.permute.xlu0 %537
        %v540 = vsel %vm530, %v512, %v538
        %v541 = vld [vmem:[%s297] sm:$0xff]
        %v542 = vmul.f32 %v535, %v541
        %vm543 = vcmask 64512
        %v544 = vsel %vm543, %v542, 0.0
        %545 = vadd.xlane.f32.xlu0 %v544
        %v546 = vpop.xlane.xlu0 %545
        %v547 = vmul.f32 %v540, %v541
        %v548 = vsel %vm543, %v547, 0.0
        %549 = vadd.xlane.f32.xlu0 %v548
        %v550 = vpop.xlane.xlu0 %549
        %vm551 = vcmp.gt.f32.partialorder %v541, 0.5
        %v552 = vsel %vm551, -2.0, %v535
        %v553 = vsel %vm543, %v552, -inf
        %554 = vmax.xlane.f32.xlu0 %v553
        %v555 = vpop.xlane.xlu0 %554
        %vm556 = vcmp.eq.s32.totalorder %v366, 0
        %v557 = vsel %vm556, %v546, 0.0
        %vm558 = vcmp.eq.s32.totalorder %v366, 1
        %v559 = vsel %vm558, %v550, 0.0
        %v560 = vadd.f32 %v557, %v559
        %vm561 = vcmp.eq.s32.totalorder %v366, 2
        %v562 = vsel %vm561, %v555, 0.0
        %v563 = vadd.f32 %v560, %v562
        %564 = vst [vmem:[%s344] sm:$0xff] %v563
        %s565 = sand.u32 %s175, 1
        %s566 = scalar_lea.sflag [#allocation7], %s565
        %s567 = sand.u32 %s175, 1
        %s568 = smul.addr %s567, 8
        %s569 = scalar_lea.vmem [#allocation11], %s568
        // Predicated region
        $region53: #{tpu_custom_call.1} parent=39 // pred_check
          %p570 = pneg %p185
        $region54: #{tpu_custom_call.1} parent=39 // pred_check_branch
          %572 = sbr.rel (%p570) target = $region56
        $region55: #{tpu_custom_call.1} parent=39 // pred_region
          %574 = vsyncadd %s566, 0
          %s575 = smul.addr %s40, 8
          %s576 = scalar_lea.hbm %s7, %s575
          %s578 = sshll.u32 %s569, 4
          %s579 = int_to_ptr.vmem [resolvable:$true] %s578
          %s580 = sshll.u32 %s576, 4
          %s581 = int_to_ptr.hbm [resolvable:$true] %s580
          %583 = dma.vmem_to_hbm [thread:$0]  %s579, 128, %s581, %s566
        $region56: #{tpu_custom_call.1} parent=39 // pred_fallthru
          _
      $region40: #{tpu_custom_call.1} parent=5 // pred_fallthru
        _
      %p584 = scmp.le.s32.totalorder 2, %s35
      // Predicated region
      $region57: #{tpu_custom_call.1} parent=5 // pred_check
        %p585 = pneg %p584
      $region58: #{tpu_custom_call.1} parent=5 // pred_check_branch
        %587 = sbr.rel (%p585) target = $region60
      $region59: #{tpu_custom_call.1} parent=5 // pred_region
        %s588 = ssub.s32 %s35, 2
        // Predicated region
        $region61: #{tpu_custom_call.1} parent=59 // pred_check
          %p589 = pneg %p191
        $region62: #{tpu_custom_call.1} parent=59 // pred_check_branch
          %591 = sbr.rel (%p589) target = $region64
        $region63: #{tpu_custom_call.1} parent=59 // pred_region
          %s592 = sand.u32 %s176, 1
          %s593 = scalar_lea.sflag [#allocation7], %s592
          %s594 = sand.u32 %s176, 1
          %s595 = smul.addr %s594, 8
          %s596 = scalar_lea.vmem [#allocation11], %s595
          %598 = dma.done %s593, 128
        $region64: #{tpu_custom_call.1} parent=59 // pred_fallthru
          _
      $region60: #{tpu_custom_call.1} parent=5 // pred_fallthru
        _
    $region6: #{tpu_custom_call.1} parent=1 // loop_footer
      %s39 = sadd.s32 1, %s35
    $region7: #{tpu_custom_call.1} parent=1 // loop_footer_branch
      %34 = sbr.rel target = $region3
    $region8: #{tpu_custom_call.1} parent=1 // loop_exit
      _
    %599 = vsyncpa [#allocation6], 1
    %s600 = scalar_lea.sflag [#allocation6], 1
    %601 = vsyncpa %s600, 1
    %602 = vsyncpa [#allocation9], 1
    %s603 = scalar_lea.sflag [#allocation9], 1
    %604 = vsyncpa %s603, 1
    %605 = vsyncpa [#allocation7], 1
    %s606 = scalar_lea.sflag [#allocation7], 1
    %607 = vsyncpa %s606, 1

</llo_original>
